<compile_context>
chip_gen: v6e
topology: v6e:2x2x1
jax: 0.10.0
libtpu: 0.0.40
codegen_flags: <defaults>
</compile_context>

<pallas_src>
import functools
import math

import jax
import jax.numpy as jnp
from jax import lax
from jax.experimental import pallas as pl
from jax.experimental.pallas import tpu as pltpu


# 48 MiB scoped VMEM: leaves headroom on v7x (64 MiB physical) and is well
# under v5e/v6e's 128 MiB.
_VMEM_LIMIT_BYTES = 48 * 1024 * 1024


def _pick_tile(dim, prefs):
    """Largest preferred tile that evenly divides `dim`, else the full dim."""
    for t in prefs:
        if t <= dim and dim % t == 0:
            return t
    return dim


# ---------------------------------------------------------------------------
# Tiled linear kernel: y = x @ w + b
# ---------------------------------------------------------------------------

def _linear_kernel(x_ref, w_ref, b_ref, o_ref, acc_ref):
    k = pl.program_id(2)

    @pl.when(k == 0)
    def _():
        acc_ref[...] = jnp.zeros_like(acc_ref)

    # MXU matmul in the input dtype, f32 accumulation.
    acc_ref[...] += jnp.dot(x_ref[...], w_ref[...],
                            preferred_element_type=jnp.float32)

    @pl.when(k == pl.num_programs(2) - 1)
    def _():
        o_ref[...] = (acc_ref[...] + b_ref[...]).astype(o_ref.dtype)


def pallas_linear(x, w, b):
    """y = x @ w + b with x:(M,K), w:(K,N) (torch weight.T), b:(N,)."""
    M, K = x.shape
    N = w.shape[1]
    tm = _pick_tile(M, (256, 128, 64, 32, 16, 8))
    tn = _pick_tile(N, (256, 128))
    tk = _pick_tile(K, (512, 256, 128))
    return pl.pallas_call(
        _linear_kernel,
        out_shape=jax.ShapeDtypeStruct((M, N), x.dtype),
        grid=(M // tm, N // tn, K // tk),
        in_specs=[
            pl.BlockSpec((tm, tk), lambda i, j, k: (i, k)),
            pl.BlockSpec((tk, tn), lambda i, j, k: (k, j)),
            pl.BlockSpec((1, tn), lambda i, j, k: (0, j)),
        ],
        out_specs=pl.BlockSpec((tm, tn), lambda i, j, k: (i, j)),
        scratch_shapes=[pltpu.VMEM((tm, tn), jnp.float32)],
        compiler_params=pltpu.CompilerParams(
            dimension_semantics=("parallel", "parallel", "arbitrary"),
            vmem_limit_bytes=_VMEM_LIMIT_BYTES),
    )(x, w, b.reshape(1, N))


# ---------------------------------------------------------------------------
# Sparse attention kernel (all heads per grid step, Sq tiled)
# ---------------------------------------------------------------------------

def _attention_kernel(*refs, scale, top_k, num_heads, head_dim,
                      window_size, has_mask):
    if has_mask:
        q_ref, k_ref, v_ref, mask_ref, o_ref = refs
    else:
        q_ref, k_ref, v_ref, o_ref = refs
        mask_ref = None

    tq = q_ref.shape[1]
    Sk = k_ref.shape[1]
    D = head_dim

    # Local attention "masking": additive +1.0 outside the window, generated
    # in-kernel from iotas (no S^2 f32 array streamed from HBM).  Shared
    # across heads, computed once per grid step.
    if window_size is not None:
        row = (lax.broadcasted_iota(jnp.int32, (tq, Sk), 0)
               + pl.program_id(1) * tq)
        col = lax.broadcasted_iota(jnp.int32, (tq, Sk), 1)
        half = window_size // 2
        inside = (col >= row - half) & (col <= row + half)
        lmask_add = jnp.where(inside, 0.0, 1.0)
    else:
        lmask_add = None

    if has_mask:
        # External mask (int8), shared across heads (torch expands it).
        kill = mask_ref[0] == 0

    # Static unroll over heads: each head reads/writes a static column slice
    # of the merged-head (tq, E) tiles, so the output block is lane-dense.
    for h in range(num_heads):
        lo = h * D
        qh = q_ref[0, :, lo:lo + D]          # (tq, D), input dtype
        kh = k_ref[0, :, lo:lo + D]          # (Sk, D)
        vh = v_ref[0, :, lo:lo + D]          # (Sk, D)

        # Q K^T without materializing a transposed K copy; f32 accumulation.
        scores = lax.dot_general(
            qh, kh, dimension_numbers=(((1,), (1,)), ((), ())),
            preferred_element_type=jnp.float32) * scale

        if lmask_add is not None:
            scores = scores + lmask_add
        if has_mask:
            scores = jnp.where(kill, -jnp.inf, scores)

        if top_k > 0:
            # Threshold-based top-k: peel off (top_k-1) row maxima, the next
            # max is the k-th largest value; entries below it become literal
            # 0.0 (matches torch's zeros_like + scatter of top-k values).
            # top_k is a static Python int -> fully unrolled.
            # TODO(synk): exact torch.topk tie-breaking is not reproduced;
            # with distinct float scores the result is identical.
            cur = scores
            for _ in range(top_k - 1):
                m = jnp.max(cur, axis=-1, keepdims=True)
                cur = jnp.where(cur >= m, -jnp.inf, cur)
            thresh = jnp.max(cur, axis=-1, keepdims=True)
            scores = jnp.where(scores >= thresh, scores, 0.0)

        # Numerically stable softmax; the reciprocal goes to the EUP slot.
        row_max = jnp.max(scores, axis=-1, keepdims=True)
        e = jnp.exp(scores - row_max)
        inv = pl.reciprocal(jnp.sum(e, axis=-1, keepdims=True), approx=True)
        weights = (e * inv).astype(vh.dtype)
        # (dropout on the weights is eval-mode identity here)
        # TODO(synk): training-mode dropout (pltpu.prng_*) not implemented.

        out_h = jnp.dot(weights, vh, preferred_element_type=jnp.float32)
        o_ref[0, :, lo:lo + D] = out_h.astype(o_ref.dtype)


def pallas_sparse_attention(q, k, v, mask, *, num_heads, top_k, window_size):
    """q:(B,Sq,E) k,v:(B,Sk,E) mask: None or (B,Sq,Sk) -> (B,Sq,E).

    Heads are split/merged implicitly inside the kernel (column slices of E),
    so no (B,H,S,D) transposes are materialized.
    """
    B, Sq, E = q.shape
    Sk = k.shape[1]
    D = E // num_heads
    scale = 1.0 / math.sqrt(D)
    tq = _pick_tile(Sq, (256, 128, 64, 32))
    has_mask = mask is not None

    kernel = functools.partial(
        _attention_kernel, scale=scale, top_k=top_k, num_heads=num_heads,
        head_dim=D, window_size=window_size, has_mask=has_mask)

    in_specs = [
        pl.BlockSpec((1, tq, E), lambda b, i: (b, i, 0)),   # q tile
        pl.BlockSpec((1, Sk, E), lambda b, i: (b, 0, 0)),   # full K per batch
        pl.BlockSpec((1, Sk, E), lambda b, i: (b, 0, 0)),   # full V per batch
    ]
    args = [q, k, v]
    if has_mask:
        in_specs.append(pl.BlockSpec((1, tq, Sk), lambda b, i: (b, i, 0)))
        args.append(mask.astype(jnp.int8))                  # 4x less DMA vs f32

    return pl.pallas_call(
        kernel,
        out_shape=jax.ShapeDtypeStruct((B, Sq, E), q.dtype),
        grid=(B, Sq // tq),
        in_specs=in_specs,
        out_specs=pl.BlockSpec((1, tq, E), lambda b, i: (b, i, 0)),
        compiler_params=pltpu.CompilerParams(
            dimension_semantics=("parallel", "parallel"),
            vmem_limit_bytes=_VMEM_LIMIT_BYTES),
    )(*args)


# ---------------------------------------------------------------------------
# Module wrapper (parameter setup + glue in plain JAX)
# ---------------------------------------------------------------------------

def _torch_linear_init(key, fan_in, fan_out):
    """Deterministic nn.Linear-style init: U(-1/sqrt(in), 1/sqrt(in))."""
    kw, kb = jax.random.split(key)
    bound = 1.0 / math.sqrt(fan_in)
    # weight stored as (in, out) == torch weight.T
    w = jax.random.uniform(kw, (fan_in, fan_out), jnp.float32, -bound, bound)
    b = jax.random.uniform(kb, (fan_out,), jnp.float32, -bound, bound)
    return w, b


def _local_attention_additive_mask(seq_q, seq_k, window_size):
    # Used only by the pure-JAX reference; the kernel builds this in-kernel.
    i = jnp.arange(seq_q)[:, None]
    j = jnp.arange(seq_k)[None, :]
    start = jnp.maximum(0, i - window_size // 2)
    end = jnp.minimum(seq_k, i + window_size // 2 + 1)
    inside = (j >= start) & (j < end)
    return jnp.where(inside, 0.0, 1.0).astype(jnp.float32)


class DynamicSparseAttentionPallas:
    def __init__(self, embed_size, num_heads, dropout=0.1, top_k=0,
                 local_attention_window=None, use_low_rank_approx=False,
                 *, key):
        assert embed_size % num_heads == 0
        self.embed_size = embed_size
        self.num_heads = num_heads
        self.head_dim = embed_size // num_heads
        self.top_k = top_k
        self.local_attention_window = local_attention_window
        self.use_low_rank_approx = use_low_rank_approx  # unused in forward
        # dropout is eval-mode identity (deterministic kernel)
        kq, kk, kv, ko = jax.random.split(key, 4)
        self.wq, self.bq = _torch_linear_init(kq, embed_size, embed_size)
        self.wk, self.bk = _torch_linear_init(kk, embed_size, embed_size)
        self.wv, self.bv = _torch_linear_init(kv, embed_size, embed_size)
        self.wo, self.bo = _torch_linear_init(ko, embed_size, embed_size)
        # Fused QKV weights for the self-attention path (one pass over x).
        self.wqkv = jnp.concatenate([self.wq, self.wk, self.wv], axis=1)
        self.bqkv = jnp.concatenate([self.bq, self.bk, self.bv], axis=0)

    def __call__(self, query, key, value, mask=None):
        B, Sq, E = query.shape
        Sk = key.shape[1]

        if (query is key) and (key is value):
            # Self-attention: fused (E, 3E) projection, one pass over x.
            qkv = pallas_linear(query.reshape(-1, E), self.wqkv, self.bqkv)
            q_lin = qkv[:, :E].reshape(B, Sq, E)
            k_lin = qkv[:, E:2 * E].reshape(B, Sk, E)
            v_lin = qkv[:, 2 * E:].reshape(B, Sk, E)
        else:
            q_lin = pallas_linear(query.reshape(-1, E), self.wq, self.bq
                                  ).reshape(B, Sq, E)
            k_lin = pallas_linear(key.reshape(-1, E), self.wk, self.bk
                                  ).reshape(B, Sk, E)
            v_lin = pallas_linear(value.reshape(-1, E), self.wv, self.bv
                                  ).reshape(B, Sk, E)

        # Head split/merge happens inside the attention kernel (column
        # slices), so no transposes here and the output is already (B,Sq,E).
        attn = pallas_sparse_attention(
            q_lin, k_lin, v_lin, mask,
            num_heads=self.num_heads, top_k=self.top_k,
            window_size=self.local_attention_window)

        out = pallas_linear(attn.reshape(-1, E), self.wo, self.bo)
        return out.reshape(B, Sq, E)


# ---------------------------------------------------------------------------
# Pure-JAX reference (for a correctness sanity check)
# ---------------------------------------------------------------------------

def _reference_forward(mod, query, key, value, mask=None):
    B, Sq, E = query.shape
    Sk = key.shape[1]
    H, D = mod.num_heads, mod.head_dim
    q = (query.reshape(-1, E) @ mod.wq + mod.bq).reshape(B, Sq, H, D).transpose(0, 2, 1, 3)
    k = (key.reshape(-1, E) @ mod.wk + mod.bk).reshape(B, Sk, H, D).transpose(0, 2, 1, 3)
    v = (value.reshape(-1, E) @ mod.wv + mod.bv).reshape(B, Sk, H, D).transpose(0, 2, 1, 3)
    scores = jnp.einsum("bhqd,bhkd->bhqk", q, k) / math.sqrt(D)
    if mod.local_attention_window is not None:
        scores = scores + _local_attention_additive_mask(
            Sq, Sk, mod.local_attention_window)[None, None]
    if mask is not None:
        scores = jnp.where(mask[:, None] == 0, -jnp.inf, scores)
    if mod.top_k > 0:
        topv, _ = jax.lax.top_k(scores, mod.top_k)
        thresh = topv[..., -1:]
        scores = jnp.where(scores >= thresh, scores, 0.0)
    w = jax.nn.softmax(scores, axis=-1)
    out = jnp.einsum("bhqk,bhkd->bhqd", w, v)
    out = out.transpose(0, 2, 1, 3).reshape(B, Sq, E)
    return (out.reshape(-1, E) @ mod.wo + mod.bo).reshape(B, Sq, E)


# ---------------------------------------------------------------------------

if __name__ == "__main__":
    B, S, E, H = 2, 8, 32, 4

    root = jax.random.PRNGKey(0)
    k_params, k_q, k_k, k_v, k_m = jax.random.split(root, 5)

    module = DynamicSparseAttentionPallas(
        embed_size=E, num_heads=H, dropout=0.1,
        top_k=3, local_attention_window=4,
        use_low_rank_approx=False, key=k_params)

    query = jax.random.normal(k_q, (B, S, E), jnp.float32)
    key = jax.random.normal(k_k, (B, S, E), jnp.float32)
    value = jax.random.normal(k_v, (B, S, E), jnp.float32)

    # Tolerance is loosened slightly because the kernel epilogue uses the
    # EUP approximate reciprocal (pl.reciprocal(approx=True)).
    TOL = dict(atol=1e-2, rtol=1e-2)

    # Path 1: distinct q/k/v (separate projections), no external mask.
    out1 = jax.block_until_ready(module(query, key, value, mask=None))
    ref1 = _reference_forward(module, query, key, value, mask=None)
    assert out1.shape == (B, S, E)
    assert jnp.allclose(out1, ref1, **TOL), "mismatch vs reference (no mask)"

    # Path 2: self-attention (fused QKV projection) with an external mask
    # (diagonal forced on so no query row is fully masked).
    mask = jnp.logical_or(jax.random.uniform(k_m, (B, S, S)) > 0.3,
                          jnp.eye(S, dtype=bool)[None])
    out2 = jax.block_until_ready(module(query, query, query, mask=mask))
    ref2 = _reference_forward(module, query, query, query, mask=mask)
    assert out2.shape == (B, S, E)
    assert jnp.allclose(out2, ref2, **TOL), "mismatch vs reference (masked)"

    print("KERNEL_OK")
</pallas_src>

<mosaic_0001>
module attributes {stable_mosaic.version = 11 : i64} {
  func.func @_linear_kernel(%arg0: i32, %arg1: i32, %arg2: i32, %arg3: memref<16x32xf32, #tpu.memory_space<vmem>>, %arg4: memref<32x32xf32, #tpu.memory_space<vmem>>, %arg5: memref<1x32xf32, #tpu.memory_space<vmem>>, %arg6: memref<16x32xf32, #tpu.memory_space<vmem>>, %arg7: memref<16x32xf32, #tpu.memory_space<vmem>>) attributes {dimension_semantics = [#tpu.dimension_semantics<parallel>, #tpu.dimension_semantics<parallel>, #tpu.dimension_semantics<arbitrary>], iteration_bounds = array<i64: 1, 1, 1>, scalar_prefetch = 0 : i64, scratch_operands = 1 : i64, tpu.core_type = #tpu.core_type<tc>, window_params = [{transform_indices = @transform_0, window_bounds = array<i64: 16, 32>}, {transform_indices = @transform_1, window_bounds = array<i64: 32, 32>}, {transform_indices = @transform_2, window_bounds = array<i64: 1, 32>}, {transform_indices = @transform_3, window_bounds = array<i64: 16, 32>}]} {
    %c0_i32 = arith.constant 0 : i32
    %0 = arith.cmpi eq, %arg2, %c0_i32 : i32
    %1 = arith.extui %0 : i1 to i32
    %c0_i32_0 = arith.constant 0 : i32
    %2 = arith.cmpi ne, %1, %c0_i32_0 : i32
    scf.if %2 {
      %cst_10 = arith.constant 0.000000e+00 : f32
      %12 = vector.broadcast %cst_10 : f32 to vector<16x32xf32>
      %c0_11 = arith.constant 0 : index
      %c0_12 = arith.constant 0 : index
      %13 = vector.load %arg7[%c0_11, %c0_12] : memref<16x32xf32, #tpu.memory_space<vmem>>, vector<16x32xf32>
      tpu.vector_store %arg7[%c0_11, %c0_12], %12 {strides = array<i32>} : memref<16x32xf32, #tpu.memory_space<vmem>>, vector<16x32xf32>,
    } else {
    }
    %c0 = arith.constant 0 : index
    %c0_1 = arith.constant 0 : index
    %3 = vector.load %arg7[%c0, %c0_1] : memref<16x32xf32, #tpu.memory_space<vmem>>, vector<16x32xf32>
    %c0_2 = arith.constant 0 : index
    %c0_3 = arith.constant 0 : index
    %4 = vector.load %arg3[%c0_2, %c0_3] : memref<16x32xf32, #tpu.memory_space<vmem>>, vector<16x32xf32>
    %c0_4 = arith.constant 0 : index
    %c0_5 = arith.constant 0 : index
    %5 = vector.load %arg4[%c0_4, %c0_5] : memref<32x32xf32, #tpu.memory_space<vmem>>, vector<32x32xf32>
    %cst = arith.constant dense<0.000000e+00> : vector<16x32xf32>
    %6 = tpu.matmul %4, %5, %cst {dimension_numbers = #tpu.dot_dimension_numbers<[1], [0], [0], [1], [0, 0, 1, 1], [], []>} : vector<16x32xf32>, vector<32x32xf32>, vector<16x32xf32> -> vector<16x32xf32>
    %7 = arith.addf %3, %6 : vector<16x32xf32>
    %c0_6 = arith.constant 0 : index
    %c0_7 = arith.constant 0 : index
    %8 = vector.load %arg7[%c0_6, %c0_7] : memref<16x32xf32, #tpu.memory_space<vmem>>, vector<16x32xf32>
    tpu.vector_store %arg7[%c0_6, %c0_7], %7 {strides = array<i32>} : memref<16x32xf32, #tpu.memory_space<vmem>>, vector<16x32xf32>,
    %c0_i32_8 = arith.constant 0 : i32
    %9 = arith.cmpi eq, %arg2, %c0_i32_8 : i32
    %10 = arith.extui %9 : i1 to i32
    %c0_i32_9 = arith.constant 0 : i32
    %11 = arith.cmpi ne, %10, %c0_i32_9 : i32
    scf.if %11 {
      %c0_10 = arith.constant 0 : index
      %c0_11 = arith.constant 0 : index
      %12 = vector.load %arg7[%c0_10, %c0_11] : memref<16x32xf32, #tpu.memory_space<vmem>>, vector<16x32xf32>
      %c0_12 = arith.constant 0 : index
      %c0_13 = arith.constant 0 : index
      %13 = vector.load %arg5[%c0_12, %c0_13] : memref<1x32xf32, #tpu.memory_space<vmem>>, vector<1x32xf32>
      %14 = vector.broadcast %13 : vector<1x32xf32> to vector<16x32xf32>
      %15 = arith.addf %12, %14 : vector<16x32xf32>
      %c0_14 = arith.constant 0 : index
      %c0_15 = arith.constant 0 : index
      %16 = vector.load %arg6[%c0_14, %c0_15] : memref<16x32xf32, #tpu.memory_space<vmem>>, vector<16x32xf32>
      tpu.vector_store %arg6[%c0_14, %c0_15], %15 {strides = array<i32>} : memref<16x32xf32, #tpu.memory_space<vmem>>, vector<16x32xf32>,
    } else {
    }
    return
  }
  func.func @transform_0(%arg0: i32, %arg1: i32, %arg2: i32) -> (i32, i32) {
    %c0_i32 = arith.constant 0 : i32
    return %arg0, %arg2 : i32, i32
  }
  func.func @transform_1(%arg0: i32, %arg1: i32, %arg2: i32) -> (i32, i32) {
    %c0_i32 = arith.constant 0 : i32
    return %arg2, %arg1 : i32, i32
  }
  func.func @transform_2(%arg0: i32, %arg1: i32, %arg2: i32) -> (i32, i32) {
    %c0_i32 = arith.constant 0 : i32
    %c0_i32_0 = arith.constant 0 : i32
    return %c0_i32, %arg1 : i32, i32
  }
  func.func @transform_3(%arg0: i32, %arg1: i32, %arg2: i32) -> (i32, i32) {
    %c0_i32 = arith.constant 0 : i32
    return %arg0, %arg1 : i32, i32
  }
}

</mosaic_0001>

<llo_original>
// kernel: tpu_custom_call.1
$region0: #{tpu_custom_call.1}
  #allocation0 [shape = 'u32[]', space=smem, size = 0x4, offset = 0x4, fixed_abs, tag = 'smem constant byte address 0x4 - core index']
  #allocation1 [shape = 'u32[144,128]{1,0:T(1,128)}', space=vmem, size = 0x12000, scoped, tag = 'internal scratch']
  #allocation2 [shape = 'f32[16,32]{1,0:T(8,128)}', space=vmem, size = 0x2000, scoped, tag = 'scratch operand']
  %s0 = inlined_call_operand.hbm [shape: f32[16,32], index: 0, kind: input, shape index: {}]
  %s1 = inlined_call_operand.hbm [shape: f32[32,32], index: 1, kind: input, shape index: {}]
  %s2 = inlined_call_operand.vmem [shape: f32[1,32], index: 2, kind: input, shape index: {}]
  %s3 = inlined_call_operand.hbm [shape: f32[16,32], index: 3, kind: output, shape index: {}]
  %s4 = sld [smem:[#allocation0]]
  $region38: #{tpu_custom_call.1} parent=0
    _
  %s6 = ssub.s32 1, %s4
  %s7 = scalar_select 0, %s6, %s4
  $region1: #{tpu_custom_call.1} parent=0
    #allocation3 [shape = 'u8[8192]{0}', space=vmem, size = 0x2000, scoped, tag = 'input window, operand 0, single buffered']
    #allocation4 [shape = 's32[1]{0}', space=sflag, size = 0x4, scoped, tag = 'scoped memory for tpu_custom_call.1']
    #allocation5 [shape = 's32[1]{0}', space=sflag, size = 0x4, scoped, tag = 'scoped memory for tpu_custom_call.1']
    #allocation6 [shape = 'u8[16384]{0}', space=vmem, size = 0x4000, scoped, tag = 'input window, operand 1, single buffered']
    #allocation7 [shape = 's32[1]{0}', space=sflag, size = 0x4, scoped, tag = 'scoped memory for tpu_custom_call.1']
    #allocation8 [shape = 'u8[8192]{0}', space=vmem, size = 0x2000, scoped, tag = 'output window, operand 0, single buffered']
    %8 = vsyncpa [#allocation4], 0
    %9 = vsyncpa [#allocation7], 0
    %10 = vsyncpa [#allocation5], 0
    // Predicated region
    $region2: #{tpu_custom_call.1} parent=1 // pred_check
      _
    $region3: #{tpu_custom_call.1} parent=1 // pred_check_branch
      %12 = sbr.rel (0) target = $region5
    $region4: #{tpu_custom_call.1} parent=1 // pred_region
      %s14 = ssub.s32 256, 256
      %15 = vsyncadd [#allocation4], %s14
      %s16 = sshll.u32 [#allocation3], 4
      %s17 = int_to_ptr.vmem [resolvable:$true] %s16
      %22 = dma.hbm_to_vmem [thread:$0]  %s0, 256, %s17, [#allocation4], 128, 128, 8
    $region5: #{tpu_custom_call.1} parent=1 // pred_fallthru
      _
    // Predicated region
    $region6: #{tpu_custom_call.1} parent=1 // pred_check
      _
    $region7: #{tpu_custom_call.1} parent=1 // pred_check_branch
      %24 = sbr.rel (0) target = $region9
    $region8: #{tpu_custom_call.1} parent=1 // pred_region
      %s26 = ssub.s32 512, 512
      %27 = vsyncadd [#allocation7], %s26
      %s28 = sshll.u32 [#allocation6], 4
      %s29 = int_to_ptr.vmem [resolvable:$true] %s28
      %34 = dma.hbm_to_vmem [thread:$0]  %s1, 512, %s29, [#allocation7], 128, 128, 8
    $region9: #{tpu_custom_call.1} parent=1 // pred_fallthru
      _
    // Predicated region
    $region10: #{tpu_custom_call.1} parent=1 // pred_check
      _
    $region11: #{tpu_custom_call.1} parent=1 // pred_check_branch
      %36 = sbr.rel (0) target = $region13
    $region12: #{tpu_custom_call.1} parent=1 // pred_region
      _
    $region13: #{tpu_custom_call.1} parent=1 // pred_fallthru
      _
    // Predicated region
    $region14: #{tpu_custom_call.1} parent=1 // pred_check
      _
    $region15: #{tpu_custom_call.1} parent=1 // pred_check_branch
      %38 = sbr.rel (0) target = $region17
    $region16: #{tpu_custom_call.1} parent=1 // pred_region
      %39 = dma.done [#allocation4], 256
    $region17: #{tpu_custom_call.1} parent=1 // pred_fallthru
      _
    // Predicated region
    $region18: #{tpu_custom_call.1} parent=1 // pred_check
      _
    $region19: #{tpu_custom_call.1} parent=1 // pred_check_branch
      %41 = sbr.rel (0) target = $region21
    $region20: #{tpu_custom_call.1} parent=1 // pred_region
      %42 = dma.done [#allocation7], 512
    $region21: #{tpu_custom_call.1} parent=1 // pred_fallthru
      _
    %p43 = scmp.eq.s32.totalorder 0, 0
    // Predicated region
    $region22: #{tpu_custom_call.1} parent=1 // pred_check
      %p44 = pneg %p43
    $region23: #{tpu_custom_call.1} parent=1 // pred_check_branch
      %46 = sbr.rel (%p44) target = $region25
    $region24: #{tpu_custom_call.1} parent=1 // pred_region
      %vm47 = vcmask 261120
      %48 = vst.msk [vmem:[#allocation2] sm:$0xff] %vm47, 0.0
      %49 = vst.msk [vmem:[#allocation2 + $0x8] sm:$0xff] %vm47, 0.0
    $region25: #{tpu_custom_call.1} parent=1 // pred_fallthru
      _
    %v50 = vld [vmem:[#allocation2] sm:$0xff]
    %v51 = vld [vmem:[#allocation2 + $0x8] sm:$0xff]
    %v52 = vld [vmem:[#allocation3] sm:$0xff]
    %v53 = vld [vmem:[#allocation3 + $0x8] sm:$0xff]
    %v54 = vld [vmem:[#allocation6] sm:$0xff]
    %v55 = vld [vmem:[#allocation6 + $0x8] sm:$0xff]
    %v56 = vld [vmem:[#allocation6 + $0x10] sm:$0xff]
    %v57 = vld [vmem:[#allocation6 + $0x18] sm:$0xff]
    %vm58 = vcmask 261120
    %v60 = vsel %vm58, %v52, 0
    %v63 = vsel %vm58, %v53, 0
    %65 = vmatprep.subr.mxu0 0.0
    %66 = vmatpush1.msra.mxu0 0.0
    %67 = vmatprep.subr.mxu0 0.0
    %68 = vmatpush1.msra.mxu0 0.0
    %69 = vmatprep.subr.mxu0 0.0
    %70 = vmatpush1.msra.mxu0 0.0
    %71 = vmatprep.subr.mxu0 0.0
    %72 = vmatpush1.msra.mxu0 0.0
    %73 = vmatprep.subr.mxu0 0.0
    %74 = vmatpush1.msra.mxu0 0.0
    %75 = vmatprep.subr.mxu0 0.0
    %76 = vmatpush1.msra.mxu0 0.0
    %77 = vmatprep.subr.mxu0 0.0
    %78 = vmatpush1.msra.mxu0 0.0
    %79 = vmatprep.subr.mxu0 0.0
    %80 = vmatpush1.msra.mxu0 0.0
    %81 = vmatprep.subr.mxu0 0.0
    %82 = vmatpush1.msra.mxu0 0.0
    %83 = vmatprep.subr.mxu0 0.0
    %84 = vmatpush1.msra.mxu0 0.0
    %85 = vmatprep.subr.mxu0 0.0
    %86 = vmatpush1.msra.mxu0 0.0
    %87 = vmatprep.subr.mxu0 0.0
    %88 = vmatpush1.msra.mxu0 0.0
    %89 = vmatprep.subr.mxu0 0.0
    %90 = vmatpush1.msra.mxu0 %v57
    %91 = vmatprep.subr.mxu0 0.0
    %92 = vmatpush1.msra.mxu0 %v56
    %93 = vmatprep.subr.mxu0 0.0
    %94 = vmatpush1.msra.mxu0 %v55
    %95 = vmatprep.subr.mxu0 0.0
    %96 = vmatpush1.msra.mxu0 %v54
    %97 = vmatprep.subr.mxu0 0.0
    %98 = vmatpush2.msra.mxu0 0.0
    %99 = vmatprep.subr.mxu0 0.0
    %100 = vmatpush2.msra.mxu0 0.0
    %101 = vmatprep.subr.mxu0 0.0
    %102 = vmatpush2.msra.mxu0 0.0
    %103 = vmatprep.subr.mxu0 0.0
    %104 = vmatpush2.msra.mxu0 0.0
    %105 = vmatprep.subr.mxu0 0.0
    %106 = vmatpush2.msra.mxu0 0.0
    %107 = vmatprep.subr.mxu0 0.0
    %108 = vmatpush2.msra.mxu0 0.0
    %109 = vmatprep.subr.mxu0 0.0
    %110 = vmatpush2.msra.mxu0 0.0
    %111 = vmatprep.subr.mxu0 0.0
    %112 = vmatpush2.msra.mxu0 0.0
    %113 = vmatprep.subr.mxu0 0.0
    %114 = vmatpush2.msra.mxu0 0.0
    %115 = vmatprep.subr.mxu0 0.0
    %116 = vmatpush2.msra.mxu0 0.0
    %117 = vmatprep.subr.mxu0 0.0
    %118 = vmatpush2.msra.mxu0 0.0
    %119 = vmatprep.subr.mxu0 0.0
    %120 = vmatpush2.msra.mxu0 0.0
    %121 = vmatprep.subr.mxu0 0.0
    %122 = vmatpush2.msra.mxu0 0.0
    %123 = vmatprep.subr.mxu0 0.0
    %124 = vmatpush2.msra.mxu0 0.0
    %125 = vmatprep.subr.mxu0 0.0
    %126 = vmatpush2.msra.mxu0 0.0
    %127 = vmatprep.subr.mxu0 0.0
    %128 = vmatpush2.msra.mxu0 0.0
    %129 = vmatprep.mubr.f32.mxu0 0.0
    %130 = vmatmul.mubr.f32.gmra.mxu0 %v60
    %v131 = vpop.f32.mrf.mxu0
    %v132 = vadd.f32 0.0, %v131
    %v133 = vpop.f32.mrf.mxu0
    %134 = vmatprep.mubr.f32.mxu0 0.0
    %135 = vmatmul.mubr.f32.gmra.mxu0 %v63
    %v136 = vpop.f32.mrf.mxu0
    %v137 = vadd.f32 0.0, %v136
    %v138 = vpop.f32.mrf.mxu0
    %139 = vdwg.mxu0
    %v140 = vadd.f32 %v50, %v132
    %v141 = vadd.f32 %v51, %v137
    %142 = vst.msk [vmem:[#allocation2] sm:$0xff] %vm58, %v140
    %143 = vst.msk [vmem:[#allocation2 + $0x8] sm:$0xff] %vm58, %v141
    // Predicated region
    $region26: #{tpu_custom_call.1} parent=1 // pred_check
      %p144 = pneg %p43
    $region27: #{tpu_custom_call.1} parent=1 // pred_check_branch
      %146 = sbr.rel (%p144) target = $region29
    $region28: #{tpu_custom_call.1} parent=1 // pred_region
      %v147 = vld [vmem:[#allocation2] sm:$0xff]
      %v148 = vld [vmem:[#allocation2 + $0x8] sm:$0xff]
      %v149 = vld [vmem:[%s2] sm:$0x1]
      %v151 = vlaneseq
      %v152 = vshrl.u32 %v151, 7
      %v153 = vsub.s32 0, %v152
      %v154 = vrot.slane %v149, %v153
      %v156 = vadd.f32 %v147, %v154
      %v157 = vadd.f32 %v148, %v154
      %158 = vst.msk [vmem:[#allocation8] sm:$0xff] %vm58, %v156
      %159 = vst.msk [vmem:[#allocation8 + $0x8] sm:$0xff] %vm58, %v157
    $region29: #{tpu_custom_call.1} parent=1 // pred_fallthru
      _
    // Predicated region
    $region30: #{tpu_custom_call.1} parent=1 // pred_check
      _
    $region31: #{tpu_custom_call.1} parent=1 // pred_check_branch
      %161 = sbr.rel (0) target = $region33
    $region32: #{tpu_custom_call.1} parent=1 // pred_region
      %s163 = ssub.s32 256, 256
      %164 = vsyncadd [#allocation5], %s163
      %s165 = sshll.u32 [#allocation8], 4
      %s166 = int_to_ptr.vmem [resolvable:$true] %s165
      %171 = dma.vmem_to_hbm [thread:$0]  %s166, 256, %s3, [#allocation5], 128, 128, 8
    $region33: #{tpu_custom_call.1} parent=1 // pred_fallthru
      _
    // Predicated region
    $region34: #{tpu_custom_call.1} parent=1 // pred_check
      _
    $region35: #{tpu_custom_call.1} parent=1 // pred_check_branch
      %173 = sbr.rel (0) target = $region37
    $region36: #{tpu_custom_call.1} parent=1 // pred_region
      %174 = dma.done [#allocation5], 256
    $region37: #{tpu_custom_call.1} parent=1 // pred_fallthru
      _
    %175 = vsyncpa [#allocation4], 1
    %176 = vsyncpa [#allocation7], 1
    %177 = vsyncpa [#allocation5], 1

</llo_original>
